<compile_context>
chip_gen: v7x
topology: tpu7x:2x2x1
jax: 0.10.0
libtpu: 0.0.40
codegen_flags: <defaults>
</compile_context>

<pallas_src>
import math

import jax
import jax.numpy as jnp
from jax.experimental import pallas as pl
from jax.experimental.pallas import tpu as pltpu


_INV_SQRT2 = 1.0 / math.sqrt(2.0)


def _gelu_exact(x):
    # PyTorch nn.GELU() default (approximate='none'): 0.5*x*(1+erf(x/sqrt(2)))
    return 0.5 * x * (1.0 + jax.lax.erf(x * _INV_SQRT2))


def _round_up(x, m):
    return (x + m - 1) // m * m


def _pad_to(arr, shape):
    pads = [(0, t - s) for s, t in zip(arr.shape, shape)]
    if any(p[1] for p in pads):
        return jnp.pad(arr, pads)
    return arr


def _vmem_capacity_bytes():
    try:
        return int(pltpu.get_tpu_info().vmem_capacity_bytes)
    except Exception:
        return 128 << 20  # v5e/v6e capacity fallback (v7x reports 64 MiB)


# ----------------------------- kernel bodies --------------------------------


def _ffn_fused_kernel(x_ref, w1_ref, b1_ref, w2_ref, b2_ref, o_ref):
    # Weight-resident path: w1/w2 block indices are constant across the grid,
    # so they are fetched once; each row tile does fc1 -> GELU -> fc2 in one shot.
    h = jnp.dot(x_ref[...], w1_ref[...], preferred_element_type=jnp.float32)
    h = _gelu_exact(h + b1_ref[...])                       # f32 GELU
    out = jnp.dot(h.astype(w2_ref.dtype), w2_ref[...],
                  preferred_element_type=jnp.float32)
    o_ref[...] = (out + b2_ref[...]).astype(o_ref.dtype)


def _ffn_streamk_kernel(x_ref, w1_ref, b1_ref, w2_ref, b2_ref, o_ref, acc_ref):
    # Streamed-weight path: hidden dim (c2) is split into tk chunks along the
    # last ("arbitrary") grid axis; fc2 accumulates into a resident f32 scratch.
    k = pl.program_id(1)

    @pl.when(k == 0)
    def _():
        # Fold b2 into the accumulator exactly once.
        acc_ref[...] = jnp.broadcast_to(b2_ref[...], acc_ref.shape)

    h = jnp.dot(x_ref[...], w1_ref[...], preferred_element_type=jnp.float32)
    h = _gelu_exact(h + b1_ref[...])                       # f32 GELU
    acc_ref[...] += jnp.dot(h.astype(w2_ref.dtype), w2_ref[...],
                            preferred_element_type=jnp.float32)

    @pl.when(k == pl.num_programs(1) - 1)
    def _():
        o_ref[...] = acc_ref[...].astype(o_ref.dtype)


# ----------------------------- tiling logic ---------------------------------


def _tile_bytes(tm, tk, c1_pad, wi, oi):
    """VMEM footprint estimate for one pipelined step (double-buffered tiles)."""
    b = 2 * tm * c1_pad * wi                  # x tile
    b += 2 * tm * c1_pad * oi                 # output tile
    b += tm * c1_pad * 4                      # f32 accumulator / result staging
    b += tm * tk * (4 + wi)                   # h intermediate (f32) + MXU cast
    b += 2 * (c1_pad * tk + tk * c1_pad) * wi  # w1 / w2 blocks
    b += 2 * (tk + c1_pad) * 4                # bias blocks (f32)
    return b


def _choose_tiles(M, c1_pad, c2, wi, oi, row_align, vmem_budget,
                  tm_user, tk_user, allow_resident):
    c2_p128 = _round_up(c2, 128)
    M_align = _round_up(max(M, 1), row_align)

    # Prefer >= 2 row tiles (the "parallel" axis shards across v7x's 2 TCs),
    # but only when each half remains a healthy MXU-sized tile.
    half_rows = _round_up(-(-M // 2), row_align)
    tm_cap = half_rows if half_rows >= 512 else M_align
    tm_cap = min(tm_cap, M_align)

    if tm_user is not None:
        tm_cands = [min(_round_up(tm_user, row_align), M_align)]
    else:
        tm_cands = []
        for c in (1024, 768, 512, 384, 256, 128, 64, 32, 16, 8):
            c = min(_round_up(c, row_align), tm_cap)
            if c not in tm_cands:
                tm_cands.append(c)

    # --- weight-resident path: single k step, weights DMA'd once -----------
    if allow_resident:
        for tm in tm_cands:
            if tm_user is None and tm < min(256, M_align):
                break  # resident-but-tiny row tiles: prefer streaming with big tm
            if _tile_bytes(tm, c2_p128, c1_pad, wi, oi) <= vmem_budget:
                return tm, c2_p128, c2_p128, True

    # --- streamed-weight path: iterate the hidden dim in tk chunks ----------
    if tk_user is not None:
        tk_cands = [min(_round_up(tk_user, 128), c2_p128)]
    else:
        tk_cands = [t for t in (1024, 512, 256, 128) if c2_p128 % t == 0] or [128]

    for tm in tm_cands:
        for tk in tk_cands:
            if _tile_bytes(tm, tk, c1_pad, wi, oi) <= vmem_budget:
                return tm, tk, _round_up(c2_p128, tk), False

    # Fallback: smallest tiles (always correct, possibly slow).
    tm = min(_round_up(8, row_align), M_align)
    return tm, 128, _round_up(c2, 128), False


# ----------------------------- public wrapper -------------------------------


def mlp_ffn(x, w1, b1, w2, b2, *, tm=None, tk=None,
            mxu_dtype=jnp.bfloat16, weight_resident=None):
    """MLP_FFN forward: gelu(x @ w1 + b1) @ w2 + b2.

    x: (B, N, c1); w1 = fc1.weight.T (c1, c2); b1 (c2,);
    w2 = fc2.weight.T (c2, c1); b2 (c1,).

    mxu_dtype: dtype of the MXU operands. Default bf16 (f32 accumulation and
        f32 GELU are kept) — a deliberate precision trade-off vs the f32
        PyTorch module. Pass None for exact f32 parity.
    weight_resident: force (True) / forbid (False) keeping w1+w2 VMEM-resident;
        None = auto, based on the chip's VMEM capacity.
    tm / tk: optional row-tile / hidden-chunk overrides (auto-derived if None).
    """
    B, N, c1 = x.shape
    c1_w, c2 = w1.shape
    assert c1_w == c1 and w2.shape == (c2, c1)
    assert b1.shape == (c2,) and b2.shape == (c1,)
    M = B * N
    out_dtype = x.dtype

    op_dtype = jnp.dtype(mxu_dtype) if mxu_dtype is not None else jnp.dtype(x.dtype)
    wi = op_dtype.itemsize
    oi = jnp.dtype(out_dtype).itemsize
    # Sub-32-bit MXU operands pack rows along sublanes: align row tiles to 16/32.
    row_align = {4: 8, 2: 16, 1: 32}.get(wi, 8)

    c1_pad = _round_up(c1, 128)               # lane-dense, unmasked output stores

    vmem_cap = _vmem_capacity_bytes()
    vmem_budget = vmem_cap - (8 << 20)        # headroom for Mosaic internal scratch

    allow_resident = (weight_resident is None) or bool(weight_resident)
    tm_eff, tk_eff, c2_pad, resident = _choose_tiles(
        M, c1_pad, c2, wi, oi, row_align, vmem_budget, tm, tk, allow_resident)
    if weight_resident and not resident:
        raise ValueError("weights do not fit VMEM-resident on this chip/shape")

    M_pad = _round_up(M, tm_eff)
    n_row = M_pad // tm_eff
    n_k = c2_pad // tk_eff

    # ---- pad + cast operands ------------------------------------------------
    x2d = _pad_to(x.reshape(M, c1), (M_pad, c1_pad)).astype(op_dtype)
    w1p = _pad_to(w1, (c1_pad, c2_pad)).astype(op_dtype)
    w2p = _pad_to(w2, (c2_pad, c1_pad)).astype(op_dtype)
    b1p = _pad_to(b1.reshape(1, c2).astype(jnp.float32), (1, c2_pad))
    b2p = _pad_to(b2.reshape(1, c1).astype(jnp.float32), (1, c1_pad))

    # ---- VMEM limit (never above physical capacity) and cost estimate -------
    est = _tile_bytes(tm_eff, tk_eff, c1_pad, wi, oi)
    vmem_limit = int(est * 1.25) + (4 << 20)
    vmem_limit = max(vmem_limit, 16 << 20)
    vmem_limit = int(min(vmem_limit, vmem_cap - (2 << 20)))

    weight_reads = 1 if (resident or n_row == 1) else n_row
    cost = pl.CostEstimate(
        flops=4 * M_pad * c1_pad * c2_pad,                       # two matmuls
        transcendentals=M_pad * c2_pad,                          # erf
        bytes_accessed=(M_pad * c1_pad * wi                      # x read
                        + M_pad * c1_pad * oi                    # out write
                        + weight_reads * 2 * c1_pad * c2_pad * wi  # w1 + w2
                        + (c2_pad + c1_pad) * 4),                # biases
    )

    if resident or n_k == 1:
        # Single hidden chunk: fused kernel, 1-D grid, weights fetched once.
        grid = (n_row,)
        in_specs = [
            pl.BlockSpec((tm_eff, c1_pad), lambda i: (i, 0)),      # x rows
            pl.BlockSpec((c1_pad, c2_pad), lambda i: (0, 0)),      # w1 (resident)
            pl.BlockSpec((1, c2_pad), lambda i: (0, 0)),           # b1
            pl.BlockSpec((c2_pad, c1_pad), lambda i: (0, 0)),      # w2 (resident)
            pl.BlockSpec((1, c1_pad), lambda i: (0, 0)),           # b2
        ]
        out_specs = pl.BlockSpec((tm_eff, c1_pad), lambda i: (i, 0))
        scratch = []
        kernel = _ffn_fused_kernel
        dims = ("parallel",)
    else:
        grid = (n_row, n_k)
        in_specs = [
            pl.BlockSpec((tm_eff, c1_pad), lambda i, k: (i, 0)),   # x rows
            pl.BlockSpec((c1_pad, tk_eff), lambda i, k: (0, k)),   # w1 chunk
            pl.BlockSpec((1, tk_eff), lambda i, k: (0, k)),        # b1 chunk
            pl.BlockSpec((tk_eff, c1_pad), lambda i, k: (k, 0)),   # w2 chunk
            pl.BlockSpec((1, c1_pad), lambda i, k: (0, 0)),        # b2
        ]
        out_specs = pl.BlockSpec((tm_eff, c1_pad), lambda i, k: (i, 0))
        scratch = [pltpu.VMEM((tm_eff, c1_pad), jnp.float32)]
        kernel = _ffn_streamk_kernel
        dims = ("parallel", "arbitrary")

    out = pl.pallas_call(
        kernel,
        out_shape=jax.ShapeDtypeStruct((M_pad, c1_pad), out_dtype),
        grid_spec=pltpu.PrefetchScalarGridSpec(
            num_scalar_prefetch=0,
            grid=grid,
            in_specs=in_specs,
            out_specs=out_specs,
            scratch_shapes=scratch,
        ),
        compiler_params=pltpu.CompilerParams(
            dimension_semantics=dims,
            vmem_limit_bytes=vmem_limit,
        ),
        cost_estimate=cost,
    )(x2d, w1p, b1p, w2p, b2p)

    return out[:M, :c1].reshape(B, N, c1)


# ----------------------------- test harness ---------------------------------


def init_mlp_ffn_params(key, c1, c2):
    """Deterministic init mimicking nn.Linear default (uniform +-1/sqrt(fan_in))."""
    k1, k2, k3, k4 = jax.random.split(key, 4)
    lim1 = 1.0 / math.sqrt(c1)
    lim2 = 1.0 / math.sqrt(c2)
    w1 = jax.random.uniform(k1, (c1, c2), jnp.float32, -lim1, lim1)  # fc1.weight.T
    b1 = jax.random.uniform(k2, (c2,), jnp.float32, -lim1, lim1)     # fc1.bias
    w2 = jax.random.uniform(k3, (c2, c1), jnp.float32, -lim2, lim2)  # fc2.weight.T
    b2 = jax.random.uniform(k4, (c1,), jnp.float32, -lim2, lim2)     # fc2.bias
    return w1, b1, w2, b2


def _reference(x, w1, b1, w2, b2):
    h = x @ w1 + b1
    h = 0.5 * h * (1.0 + jax.lax.erf(h * _INV_SQRT2))
    return h @ w2 + b2


if __name__ == "__main__":
    key = jax.random.PRNGKey(0)

    # --- test 1: small (B, N, c1), exact f32 path (mxu_dtype=None) ---
    B, N, c1, c2 = 2, 8, 32, 64
    kx, kp, kq = jax.random.split(key, 3)
    x = jax.random.normal(kx, (B, N, c1), jnp.float32)
    w1, b1, w2, b2 = init_mlp_ffn_params(kp, c1, c2)

    out = jax.block_until_ready(mlp_ffn(x, w1, b1, w2, b2, mxu_dtype=None))
    ref = _reference(x, w1, b1, w2, b2)
    assert out.shape == (B, N, c1)
    assert jnp.allclose(out, ref, atol=1e-4, rtol=1e-4), "f32 mismatch vs reference"

    # --- test 1b: default bf16 MXU operands (f32 accumulation), loose tol ---
    out_bf16 = jax.block_until_ready(mlp_ffn(x, w1, b1, w2, b2))
    assert jnp.allclose(out_bf16, ref, atol=1e-1, rtol=1e-1), "bf16 mismatch"

    # --- test 2: ragged / non-128 dims, force streamed multi-k accumulation ---
    B2, N2, c1b, c2b = 1, 5, 48, 200
    x2 = jax.random.normal(kq, (B2, N2, c1b), jnp.float32)
    w1b, b1b, w2b, b2b = init_mlp_ffn_params(kp, c1b, c2b)
    out2 = jax.block_until_ready(
        mlp_ffn(x2, w1b, b1b, w2b, b2b, mxu_dtype=None,
                weight_resident=False, tk=128))
    ref2 = _reference(x2, w1b, b1b, w2b, b2b)
    assert out2.shape == (B2, N2, c1b)
    assert jnp.allclose(out2, ref2, atol=1e-4, rtol=1e-4), "streamed-k mismatch"

    # --- test 3: multiple row tiles on the resident/fused path (bf16) ---
    B3, N3, c1c, c2c = 4, 128, 128, 256
    kx3 = jax.random.fold_in(kx, 3)
    x3 = jax.random.normal(kx3, (B3, N3, c1c), jnp.float32)
    w1c, b1c, w2c, b2c = init_mlp_ffn_params(kp, c1c, c2c)
    out3 = jax.block_until_ready(mlp_ffn(x3, w1c, b1c, w2c, b2c, tm=256))
    ref3 = _reference(x3, w1c, b1c, w2c, b2c)
    assert out3.shape == (B3, N3, c1c)
    assert jnp.allclose(out3, ref3, atol=5e-2, rtol=5e-2), "multi-tile bf16 mismatch"

    print("KERNEL_OK")
</pallas_src>

<mosaic_0001>
module attributes {stable_mosaic.version = 11 : i64} {
  func.func @_ffn_fused_kernel(%arg0: i32, %arg1: memref<16x128xf32, #tpu.memory_space<vmem>>, %arg2: memref<128x128xf32, #tpu.memory_space<vmem>>, %arg3: memref<1x128xf32, #tpu.memory_space<vmem>>, %arg4: memref<128x128xf32, #tpu.memory_space<vmem>>, %arg5: memref<1x128xf32, #tpu.memory_space<vmem>>, %arg6: memref<16x128xf32, #tpu.memory_space<vmem>>) attributes {dimension_semantics = [#tpu.dimension_semantics<parallel>], iteration_bounds = array<i64: 1>, scalar_prefetch = 0 : i64, scratch_operands = 0 : i64, tpu.core_type = #tpu.core_type<tc>, window_params = [{transform_indices = @transform_0, window_bounds = array<i64: 16, 128>}, {pipeline_mode = #tpu.pipeline_mode<synchronous>, transform_indices = @transform_1, window_bounds = array<i64: 128, 128>}, {pipeline_mode = #tpu.pipeline_mode<synchronous>, transform_indices = @transform_2, window_bounds = array<i64: 1, 128>}, {pipeline_mode = #tpu.pipeline_mode<synchronous>, transform_indices = @transform_3, window_bounds = array<i64: 128, 128>}, {pipeline_mode = #tpu.pipeline_mode<synchronous>, transform_indices = @transform_4, window_bounds = array<i64: 1, 128>}, {transform_indices = @transform_5, window_bounds = array<i64: 16, 128>}]} {
    %c0 = arith.constant 0 : index
    %c0_0 = arith.constant 0 : index
    %0 = vector.load %arg1[%c0, %c0_0] : memref<16x128xf32, #tpu.memory_space<vmem>>, vector<16x128xf32>
    %c0_1 = arith.constant 0 : index
    %c0_2 = arith.constant 0 : index
    %1 = vector.load %arg2[%c0_1, %c0_2] : memref<128x128xf32, #tpu.memory_space<vmem>>, vector<128x128xf32>
    %cst = arith.constant dense<0.000000e+00> : vector<16x128xf32>
    %2 = tpu.matmul %0, %1, %cst {dimension_numbers = #tpu.dot_dimension_numbers<[1], [0], [0], [1], [0, 0, 1, 1], [], []>} : vector<16x128xf32>, vector<128x128xf32>, vector<16x128xf32> -> vector<16x128xf32>
    %c0_3 = arith.constant 0 : index
    %c0_4 = arith.constant 0 : index
    %3 = vector.load %arg3[%c0_3, %c0_4] : memref<1x128xf32, #tpu.memory_space<vmem>>, vector<1x128xf32>
    %4 = vector.broadcast %3 : vector<1x128xf32> to vector<16x128xf32>
    %5 = arith.addf %2, %4 : vector<16x128xf32>
    %cst_5 = arith.constant 5.000000e-01 : f32
    %6 = vector.broadcast %cst_5 : f32 to vector<16x128xf32>
    %7 = arith.mulf %6, %5 : vector<16x128xf32>
    %cst_6 = arith.constant 0.707106769 : f32
    %8 = vector.broadcast %cst_6 : f32 to vector<16x128xf32>
    %9 = arith.mulf %5, %8 : vector<16x128xf32>
    %10 = math.erf %9 : vector<16x128xf32>
    %cst_7 = arith.constant 1.000000e+00 : f32
    %11 = vector.broadcast %cst_7 : f32 to vector<16x128xf32>
    %12 = arith.addf %11, %10 : vector<16x128xf32>
    %13 = arith.mulf %7, %12 : vector<16x128xf32>
    %c0_8 = arith.constant 0 : index
    %c0_9 = arith.constant 0 : index
    %14 = vector.load %arg4[%c0_8, %c0_9] : memref<128x128xf32, #tpu.memory_space<vmem>>, vector<128x128xf32>
    %cst_10 = arith.constant dense<0.000000e+00> : vector<16x128xf32>
    %15 = tpu.matmul %13, %14, %cst_10 {dimension_numbers = #tpu.dot_dimension_numbers<[1], [0], [0], [1], [0, 0, 1, 1], [], []>} : vector<16x128xf32>, vector<128x128xf32>, vector<16x128xf32> -> vector<16x128xf32>
    %c0_11 = arith.constant 0 : index
    %c0_12 = arith.constant 0 : index
    %16 = vector.load %arg5[%c0_11, %c0_12] : memref<1x128xf32, #tpu.memory_space<vmem>>, vector<1x128xf32>
    %17 = vector.broadcast %16 : vector<1x128xf32> to vector<16x128xf32>
    %18 = arith.addf %15, %17 : vector<16x128xf32>
    %c0_13 = arith.constant 0 : index
    %c0_14 = arith.constant 0 : index
    %19 = vector.load %arg6[%c0_13, %c0_14] : memref<16x128xf32, #tpu.memory_space<vmem>>, vector<16x128xf32>
    tpu.vector_store %arg6[%c0_13, %c0_14], %18 {strides = array<i32>} : memref<16x128xf32, #tpu.memory_space<vmem>>, vector<16x128xf32>,
    return
  }
  func.func @transform_0(%arg0: i32) -> (i32, i32) {
    %c0_i32 = arith.constant 0 : i32
    %c0_i32_0 = arith.constant 0 : i32
    return %arg0, %c0_i32 : i32, i32
  }
  func.func @transform_1(%arg0: i32) -> (i32, i32) {
    %c0_i32 = arith.constant 0 : i32
    %c0_i32_0 = arith.constant 0 : i32
    %c0_i32_1 = arith.constant 0 : i32
    return %c0_i32, %c0_i32_0 : i32, i32
  }
  func.func @transform_2(%arg0: i32) -> (i32, i32) {
    %c0_i32 = arith.constant 0 : i32
    %c0_i32_0 = arith.constant 0 : i32
    %c0_i32_1 = arith.constant 0 : i32
    return %c0_i32, %c0_i32_0 : i32, i32
  }
  func.func @transform_3(%arg0: i32) -> (i32, i32) {
    %c0_i32 = arith.constant 0 : i32
    %c0_i32_0 = arith.constant 0 : i32
    %c0_i32_1 = arith.constant 0 : i32
    return %c0_i32, %c0_i32_0 : i32, i32
  }
  func.func @transform_4(%arg0: i32) -> (i32, i32) {
    %c0_i32 = arith.constant 0 : i32
    %c0_i32_0 = arith.constant 0 : i32
    %c0_i32_1 = arith.constant 0 : i32
    return %c0_i32, %c0_i32_0 : i32, i32
  }
  func.func @transform_5(%arg0: i32) -> (i32, i32) {
    %c0_i32 = arith.constant 0 : i32
    %c0_i32_0 = arith.constant 0 : i32
    return %arg0, %c0_i32 : i32, i32
  }
}

</mosaic_0001>

<llo_original>
// kernel: tpu_custom_call.1
$region0: #{tpu_custom_call.1}
  #allocation0 [shape = 'u32[]', space=smem, size = 0x4, offset = 0x4, fixed_abs, tag = 'smem constant byte address 0x4 - core index']
  #allocation1 [shape = 'u32[144,128]{1,0:T(1,128)}', space=vmem, size = 0x12000, scoped, tag = 'internal scratch']
  %s0 = inlined_call_operand.hbm [shape: f32[16,128], index: 0, kind: input, shape index: {}]
  %s1 = inlined_call_operand.hbm [shape: f32[128,128], index: 1, kind: input, shape index: {}]
  %s2 = inlined_call_operand.vmem [shape: f32[1,128], index: 2, kind: input, shape index: {}]
  %s3 = inlined_call_operand.hbm [shape: f32[128,128], index: 3, kind: input, shape index: {}]
  %s4 = inlined_call_operand.vmem [shape: f32[1,128], index: 4, kind: input, shape index: {}]
  %s5 = inlined_call_operand.hbm [shape: f32[16,128], index: 5, kind: output, shape index: {}]
  %s6 = sld [smem:[#allocation0]]
  $region42: #{tpu_custom_call.1} parent=0
    _
  %s8 = ssub.s32 1, %s6
  %s9 = scalar_select 0, %s8, %s6
  $region1: #{tpu_custom_call.1} parent=0
    #allocation2 [shape = 'u8[8192]{0}', space=vmem, size = 0x2000, scoped, tag = 'input window, operand 0, single buffered']
    #allocation3 [shape = 's32[1]{0}', space=sflag, size = 0x4, scoped, tag = 'scoped memory for tpu_custom_call.1']
    #allocation4 [shape = 's32[1]{0}', space=sflag, size = 0x4, scoped, tag = 'scoped memory for tpu_custom_call.1']
    #allocation5 [shape = 'u8[65536]{0}', space=vmem, size = 0x10000, scoped, tag = 'input window, operand 1, single buffered']
    #allocation6 [shape = 's32[1]{0}', space=sflag, size = 0x4, scoped, tag = 'scoped memory for tpu_custom_call.1']
    #allocation7 [shape = 'u8[65536]{0}', space=vmem, size = 0x10000, scoped, tag = 'input window, operand 3, single buffered']
    #allocation8 [shape = 'u8[8192]{0}', space=vmem, size = 0x2000, scoped, tag = 'output window, operand 0, single buffered']
    %10 = vsyncpa [#allocation3], 0
    %11 = vsyncpa [#allocation6], 0
    %12 = vsyncpa [#allocation4], 0
    // Predicated region
    $region2: #{tpu_custom_call.1} parent=1 // pred_check
      _
    $region3: #{tpu_custom_call.1} parent=1 // pred_check_branch
      %14 = sbr.rel (0) target = $region5
    $region4: #{tpu_custom_call.1} parent=1 // pred_region
      %s16 = ssub.s32 256, 256
      %17 = vsyncadd [#allocation3], %s16
      %s18 = sshll.u32 [#allocation2], 4
      %s19 = int_to_ptr.vmem [resolvable:$true] %s18
      %24 = dma.hbm_to_vmem [thread:$0]  %s0, 256, %s19, [#allocation3], 128, 128, 8
    $region5: #{tpu_custom_call.1} parent=1 // pred_fallthru
      _
    // Predicated region
    $region6: #{tpu_custom_call.1} parent=1 // pred_check
      _
    $region7: #{tpu_custom_call.1} parent=1 // pred_check_branch
      %26 = sbr.rel (0) target = $region9
    $region8: #{tpu_custom_call.1} parent=1 // pred_region
      %s28 = ssub.s32 2048, 2048
      %29 = vsyncadd [#allocation6], %s28
      %s30 = sshll.u32 [#allocation5], 4
      %s31 = int_to_ptr.vmem [resolvable:$true] %s30
      %36 = dma.hbm_to_vmem [thread:$0]  %s1, 2048, %s31, [#allocation6], 128, 128, 8
    $region9: #{tpu_custom_call.1} parent=1 // pred_fallthru
      _
    // Predicated region
    $region10: #{tpu_custom_call.1} parent=1 // pred_check
      _
    $region11: #{tpu_custom_call.1} parent=1 // pred_check_branch
      %38 = sbr.rel (0) target = $region13
    $region12: #{tpu_custom_call.1} parent=1 // pred_region
      _
    $region13: #{tpu_custom_call.1} parent=1 // pred_fallthru
      _
    // Predicated region
    $region14: #{tpu_custom_call.1} parent=1 // pred_check
      _
    $region15: #{tpu_custom_call.1} parent=1 // pred_check_branch
      %40 = sbr.rel (0) target = $region17
    $region16: #{tpu_custom_call.1} parent=1 // pred_region
      %s42 = ssub.s32 2048, 2048
      %43 = vsyncadd [#allocation6], %s42
      %s44 = sshll.u32 [#allocation7], 4
      %s45 = int_to_ptr.vmem [resolvable:$true] %s44
      %50 = dma.hbm_to_vmem [thread:$0]  %s3, 2048, %s45, [#allocation6], 128, 128, 8
    $region17: #{tpu_custom_call.1} parent=1 // pred_fallthru
      _
    // Predicated region
    $region18: #{tpu_custom_call.1} parent=1 // pred_check
      _
    $region19: #{tpu_custom_call.1} parent=1 // pred_check_branch
      %52 = sbr.rel (0) target = $region21
    $region20: #{tpu_custom_call.1} parent=1 // pred_region
      _
    $region21: #{tpu_custom_call.1} parent=1 // pred_fallthru
      _
    // Predicated region
    $region22: #{tpu_custom_call.1} parent=1 // pred_check
      _
    $region23: #{tpu_custom_call.1} parent=1 // pred_check_branch
      %54 = sbr.rel (0) target = $region25
    $region24: #{tpu_custom_call.1} parent=1 // pred_region
      %55 = dma.done [#allocation3], 256
    $region25: #{tpu_custom_call.1} parent=1 // pred_fallthru
      _
    // Predicated region
    $region26: #{tpu_custom_call.1} parent=1 // pred_check
      _
    $region27: #{tpu_custom_call.1} parent=1 // pred_check_branch
      %57 = sbr.rel (0) target = $region29
    $region28: #{tpu_custom_call.1} parent=1 // pred_region
      %58 = dma.done [#allocation6], 2048
    $region29: #{tpu_custom_call.1} parent=1 // pred_fallthru
      _
    // Predicated region
    $region30: #{tpu_custom_call.1} parent=1 // pred_check
      _
    $region31: #{tpu_custom_call.1} parent=1 // pred_check_branch
      %60 = sbr.rel (0) target = $region33
    $region32: #{tpu_custom_call.1} parent=1 // pred_region
      %61 = dma.done [#allocation6], 2048
    $region33: #{tpu_custom_call.1} parent=1 // pred_fallthru
      _
    %v62 = vld [vmem:[#allocation2] sm:$0xff]
    %v63 = vld [vmem:[#allocation2 + $0x8] sm:$0xff]
    %v64 = vld [vmem:[#allocation5] sm:$0xff]
    %v65 = vld [vmem:[#allocation5 + $0x8] sm:$0xff]
    %v66 = vld [vmem:[#allocation5 + $0x10] sm:$0xff]
    %v67 = vld [vmem:[#allocation5 + $0x18] sm:$0xff]
    %v68 = vld [vmem:[#allocation5 + $0x20] sm:$0xff]
    %v69 = vld [vmem:[#allocation5 + $0x28] sm:$0xff]
    %v70 = vld [vmem:[#allocation5 + $0x30] sm:$0xff]
    %v71 = vld [vmem:[#allocation5 + $0x38] sm:$0xff]
    %v72 = vld [vmem:[#allocation5 + $0x40] sm:$0xff]
    %v73 = vld [vmem:[#allocation5 + $0x48] sm:$0xff]
    %v74 = vld [vmem:[#allocation5 + $0x50] sm:$0xff]
    %v75 = vld [vmem:[#allocation5 + $0x58] sm:$0xff]
    %v76 = vld [vmem:[#allocation5 + $0x60] sm:$0xff]
    %v77 = vld [vmem:[#allocation5 + $0x68] sm:$0xff]
    %v78 = vld [vmem:[#allocation5 + $0x70] sm:$0xff]
    %v79 = vld [vmem:[#allocation5 + $0x78] sm:$0xff]
    %v80 = vld [vmem:[%s2] sm:$0x1]
    %v82 = vlaneseq
    %v83 = vshrl.u32 %v82, 7
    %v84 = vsub.s32 0, %v83
    %v85 = vrot.slane %v80, %v84
    %87 = vmatprep.subr.mxu0 0.0
    %88 = vmatpush1.msra.mxu0 %v64
    %89 = vmatprep.subr.mxu0 0.0
    %90 = vmatpush1.msra.mxu0 %v65
    %91 = vmatprep.subr.mxu0 0.0
    %92 = vmatpush1.msra.mxu0 %v66
    %93 = vmatprep.subr.mxu0 0.0
    %94 = vmatpush1.msra.mxu0 %v67
    %95 = vmatprep.subr.mxu0 0.0
    %96 = vmatpush1.msra.mxu0 %v68
    %97 = vmatprep.subr.mxu0 0.0
    %98 = vmatpush1.msra.mxu0 %v69
    %99 = vmatprep.subr.mxu0 0.0
    %100 = vmatpush1.msra.mxu0 %v70
    %101 = vmatprep.subr.mxu0 0.0
    %102 = vmatpush1.msra.mxu0 %v71
    %103 = vmatprep.subr.mxu0 0.0
    %104 = vmatpush1.msra.mxu0 %v72
    %105 = vmatprep.subr.mxu0 0.0
    %106 = vmatpush1.msra.mxu0 %v73
    %107 = vmatprep.subr.mxu0 0.0
    %108 = vmatpush1.msra.mxu0 %v74
    %109 = vmatprep.subr.mxu0 0.0
    %110 = vmatpush1.msra.mxu0 %v75
    %111 = vmatprep.subr.mxu0 0.0
    %112 = vmatpush1.msra.mxu0 %v76
    %113 = vmatprep.subr.mxu0 0.0
    %114 = vmatpush1.msra.mxu0 %v77
    %115 = vmatprep.subr.mxu0 0.0
    %116 = vmatpush1.msra.mxu0 %v78
    %117 = vmatprep.subr.mxu0 0.0
    %118 = vmatpush1.msra.mxu0 %v79
    %119 = vmatprep.subr.mxu0 0.0
    %120 = vmatpush1.msra.mxu0 0.0
    %121 = vmatprep.subr.mxu0 0.0
    %122 = vmatpush1.msra.mxu0 0.0
    %123 = vmatprep.subr.mxu0 0.0
    %124 = vmatpush1.msra.mxu0 0.0
    %125 = vmatprep.subr.mxu0 0.0
    %126 = vmatpush1.msra.mxu0 0.0
    %127 = vmatprep.subr.mxu0 0.0
    %128 = vmatpush1.msra.mxu0 0.0
    %129 = vmatprep.subr.mxu0 0.0
    %130 = vmatpush1.msra.mxu0 0.0
    %131 = vmatprep.subr.mxu0 0.0
    %132 = vmatpush1.msra.mxu0 0.0
    %133 = vmatprep.subr.mxu0 0.0
    %134 = vmatpush1.msra.mxu0 0.0
    %135 = vmatprep.subr.mxu0 0.0
    %136 = vmatpush1.msra.mxu0 0.0
    %137 = vmatprep.subr.mxu0 0.0
    %138 = vmatpush1.msra.mxu0 0.0
    %139 = vmatprep.subr.mxu0 0.0
    %140 = vmatpush1.msra.mxu0 0.0
    %141 = vmatprep.subr.mxu0 0.0
    %142 = vmatpush1.msra.mxu0 0.0
    %143 = vmatprep.subr.mxu0 0.0
    %144 = vmatpush1.msra.mxu0 0.0
    %145 = vmatprep.subr.mxu0 0.0
    %146 = vmatpush1.msra.mxu0 0.0
    %147 = vmatprep.subr.mxu0 0.0
    %148 = vmatpush1.msra.mxu0 0.0
    %149 = vmatprep.subr.mxu0 0.0
    %150 = vmatpush1.msra.mxu0 0.0
    %151 = vmatprep.mubr.f32.mxu0 0.0
    %152 = vmatmul.mubr.f32.gmra.mrb[0].mxu0 %v62
    %v153 = vpop.f32.mrb[0].mxu0
    %v154 = vadd.f32 %v85, %v153
    %v155 = vpop.f32.mrb[0].mxu0
    %156 = vmatprep.mubr.f32.mxu0 0.0
    %157 = vmatmul.mubr.f32.gmra.mrb[0].mxu0 %v63
    %v158 = vpop.f32.mrb[0].mxu0
    %v159 = vadd.f32 %v85, %v158
    %v160 = vpop.f32.mrb[0].mxu0
    %161 = vdwg.mxu0
    %v162 = vmul.f32 %v154, 0.5
    %v163 = vmul.f32 %v159, 0.5
    %v164 = vmul.f32 %v154, 0.70710677
    %v165 = vmul.f32 %v159, 0.70710677
    %v166 = verf.f32.pop %v164
    %v167 = verf.f32.pop %v165
    %v168 = vadd.f32 %v166, 1.0
    %v169 = vadd.f32 %v167, 1.0
    %v170 = vmul.f32 %v162, %v168
    %v171 = vmul.f32 %v163, %v169
    %v172 = vld [vmem:[#allocation7] sm:$0xff]
    %v173 = vld [vmem:[#allocation7 + $0x8] sm:$0xff]
    %v174 = vld [vmem:[#allocation7 + $0x10] sm:$0xff]
    %v175 = vld [vmem:[#allocation7 + $0x18] sm:$0xff]
    %v176 = vld [vmem:[#allocation7 + $0x20] sm:$0xff]
    %v177 = vld [vmem:[#allocation7 + $0x28] sm:$0xff]
    %v178 = vld [vmem:[#allocation7 + $0x30] sm:$0xff]
    %v179 = vld [vmem:[#allocation7 + $0x38] sm:$0xff]
    %v180 = vld [vmem:[#allocation7 + $0x40] sm:$0xff]
    %v181 = vld [vmem:[#allocation7 + $0x48] sm:$0xff]
    %v182 = vld [vmem:[#allocation7 + $0x50] sm:$0xff]
    %v183 = vld [vmem:[#allocation7 + $0x58] sm:$0xff]
    %v184 = vld [vmem:[#allocation7 + $0x60] sm:$0xff]
    %v185 = vld [vmem:[#allocation7 + $0x68] sm:$0xff]
    %v186 = vld [vmem:[#allocation7 + $0x70] sm:$0xff]
    %v187 = vld [vmem:[#allocation7 + $0x78] sm:$0xff]
    %v188 = vld [vmem:[%s4] sm:$0x1]
    %v190 = vlaneseq
    %v191 = vshrl.u32 %v190, 7
    %v192 = vsub.s32 0, %v191
    %v193 = vrot.slane %v188, %v192
    %195 = vmatprep.subr.mxu0 0.0
    %196 = vmatpush1.msra.mxu0 %v172
    %197 = vmatprep.subr.mxu0 0.0
    %198 = vmatpush1.msra.mxu0 %v173
    %199 = vmatprep.subr.mxu0 0.0
    %200 = vmatpush1.msra.mxu0 %v174
    %201 = vmatprep.subr.mxu0 0.0
    %202 = vmatpush1.msra.mxu0 %v175
    %203 = vmatprep.subr.mxu0 0.0
    %204 = vmatpush1.msra.mxu0 %v176
    %205 = vmatprep.subr.mxu0 0.0
    %206 = vmatpush1.msra.mxu0 %v177
    %207 = vmatprep.subr.mxu0 0.0
    %208 = vmatpush1.msra.mxu0 %v178
    %209 = vmatprep.subr.mxu0 0.0
    %210 = vmatpush1.msra.mxu0 %v179
    %211 = vmatprep.subr.mxu0 0.0
    %212 = vmatpush1.msra.mxu0 %v180
    %213 = vmatprep.subr.mxu0 0.0
    %214 = vmatpush1.msra.mxu0 %v181
    %215 = vmatprep.subr.mxu0 0.0
    %216 = vmatpush1.msra.mxu0 %v182
    %217 = vmatprep.subr.mxu0 0.0
    %218 = vmatpush1.msra.mxu0 %v183
    %219 = vmatprep.subr.mxu0 0.0
    %220 = vmatpush1.msra.mxu0 %v184
    %221 = vmatprep.subr.mxu0 0.0
    %222 = vmatpush1.msra.mxu0 %v185
    %223 = vmatprep.subr.mxu0 0.0
    %224 = vmatpush1.msra.mxu0 %v186
    %225 = vmatprep.subr.mxu0 0.0
    %226 = vmatpush1.msra.mxu0 %v187
    %227 = vmatprep.subr.mxu0 0.0
    %228 = vmatpush1.msra.mxu0 0.0
    %229 = vmatprep.subr.mxu0 0.0
    %230 = vmatpush1.msra.mxu0 0.0
    %231 = vmatprep.subr.mxu0 0.0
    %232 = vmatpush1.msra.mxu0 0.0
    %233 = vmatprep.subr.mxu0 0.0
    %234 = vmatpush1.msra.mxu0 0.0
    %235 = vmatprep.subr.mxu0 0.0
    %236 = vmatpush1.msra.mxu0 0.0
    %237 = vmatprep.subr.mxu0 0.0
    %238 = vmatpush1.msra.mxu0 0.0
    %239 = vmatprep.subr.mxu0 0.0
    %240 = vmatpush1.msra.mxu0 0.0
    %241 = vmatprep.subr.mxu0 0.0
    %242 = vmatpush1.msra.mxu0 0.0
    %243 = vmatprep.subr.mxu0 0.0
    %244 = vmatpush1.msra.mxu0 0.0
    %245 = vmatprep.subr.mxu0 0.0
    %246 = vmatpush1.msra.mxu0 0.0
    %247 = vmatprep.subr.mxu0 0.0
    %248 = vmatpush1.msra.mxu0 0.0
    %249 = vmatprep.subr.mxu0 0.0
    %250 = vmatpush1.msra.mxu0 0.0
    %251 = vmatprep.subr.mxu0 0.0
    %252 = vmatpush1.msra.mxu0 0.0
    %253 = vmatprep.subr.mxu0 0.0
    %254 = vmatpush1.msra.mxu0 0.0
    %255 = vmatprep.subr.mxu0 0.0
    %256 = vmatpush1.msra.mxu0 0.0
    %257 = vmatprep.subr.mxu0 0.0
    %258 = vmatpush1.msra.mxu0 0.0
    %259 = vmatprep.mubr.f32.mxu0 0.0
    %260 = vmatmul.mubr.f32.gmra.mrb[0].mxu0 %v170
    %v261 = vpop.f32.mrb[0].mxu0
    %v262 = vadd.f32 %v193, %v261
    %v263 = vpop.f32.mrb[0].mxu0
    %264 = vmatprep.mubr.f32.mxu0 0.0
    %265 = vmatmul.mubr.f32.gmra.mrb[0].mxu0 %v171
    %v266 = vpop.f32.mrb[0].mxu0
    %v267 = vadd.f32 %v193, %v266
    %v268 = vpop.f32.mrb[0].mxu0
    %269 = vdwg.mxu0
    %270 = vst [vmem:[#allocation8] sm:$0xff] %v262
    %271 = vst [vmem:[#allocation8 + $0x8] sm:$0xff] %v267
    // Predicated region
    $region34: #{tpu_custom_call.1} parent=1 // pred_check
      _
    $region35: #{tpu_custom_call.1} parent=1 // pred_check_branch
      %273 = sbr.rel (0) target = $region37
    $region36: #{tpu_custom_call.1} parent=1 // pred_region
      %s275 = ssub.s32 256, 256
      %276 = vsyncadd [#allocation4], %s275
      %s277 = sshll.u32 [#allocation8], 4
      %s278 = int_to_ptr.vmem [resolvable:$true] %s277
      %283 = dma.vmem_to_hbm [thread:$0]  %s278, 256, %s5, [#allocation4], 128, 128, 8
    $region37: #{tpu_custom_call.1} parent=1 // pred_fallthru
      _
    // Predicated region
    $region38: #{tpu_custom_call.1} parent=1 // pred_check
      _
    $region39: #{tpu_custom_call.1} parent=1 // pred_check_branch
      %285 = sbr.rel (0) target = $region41
    $region40: #{tpu_custom_call.1} parent=1 // pred_region
      %286 = dma.done [#allocation4], 256
    $region41: #{tpu_custom_call.1} parent=1 // pred_fallthru
      _
    %287 = vsyncpa [#allocation3], 1
    %288 = vsyncpa [#allocation6], 1
    %289 = vsyncpa [#allocation4], 1

</llo_original>
